<compile_context>
chip_gen: v7x
topology: tpu7x:2x2x1
jax: 0.10.0
libtpu: 0.0.40
codegen_flags: <defaults>
</compile_context>

<pallas_src>
import functools
import math

import jax
import jax.numpy as jnp
import numpy as np
from jax.experimental import pallas as pl
from jax.experimental.pallas import tpu as pltpu


# ----------------------------------------------------------------------------
# Kernel: per-row affine + hinge accumulation.
#   param_ref : (TM, 2K-2) fused per-row table
#                 col 0        -> intercept a
#                 col 1        -> first-segment slope c0
#                 cols 2..K-1  -> slope deltas c_1 .. c_{K-2}
#                 cols K..     -> hinge locations knot_1 .. knot_{K-2}
#   x_ref     : (TM, TN) one tile of the flattened input
#   o_ref     : (TM, TN) matching output tile
# ----------------------------------------------------------------------------
def _pwl_hinge_kernel(param_ref, x_ref, o_ref, *, num_hinges, knot_off):
    x = x_ref[...].astype(jnp.float32)                        # (TM, TN)
    acc = param_ref[:, 0:1] + param_ref[:, 1:2] * x           # a + c0 * x
    for j in range(num_hinges):                               # K is small; unrolled
        cj = param_ref[:, j + 2:j + 3]
        kj = param_ref[:, knot_off + j:knot_off + j + 1]
        acc = acc + cj * jnp.maximum(x - kj, 0.0)
    o_ref[...] = acc.astype(o_ref.dtype)


# ----------------------------------------------------------------------------
# Parameter glue (done once, outside the kernel)
# ----------------------------------------------------------------------------
def _inverse_pwl_tables(x_positions, y_starts, y_deltas, monotonicity):
    """Breakpoint tables of InversedMonoPointPWL, expressed for an
    ascending-sorted segment search (faithful to torchpwl.calibrate1d)."""
    xp_f = x_positions.astype(jnp.float32)                    # peer x_positions (C, K)
    ys = y_starts.astype(jnp.float32)                         # (C,)
    yd = y_deltas.astype(jnp.float32)                         # (C, K-1)
    deltas = monotonicity * jnp.abs(yd)
    yp_fwd = jnp.concatenate(
        [ys[:, None], ys[:, None] + jnp.cumsum(deltas, axis=1)], axis=1)  # (C, K)
    if monotonicity < 0:
        # Module sorts both tables descending; calibrate1d re-sorts the
        # breakpoints ascending for segment selection but gathers y values in
        # the module's (descending) order -- reproduce that literally.
        xp_inv = yp_fwd[:, ::-1]                    # ascending breakpoints
        yp_inv = -jnp.sort(-xp_f, axis=1)           # descending-sorted peer x_positions
    else:
        xp_inv = yp_fwd                             # already ascending
        yp_inv = jnp.sort(xp_f, axis=1)             # ascending-sorted peer x_positions
    return xp_inv, yp_inv


def _fused_hinge_table(xp, yp):
    """Fused [a, c0, slope-deltas, knots] table.

    NOTE: assumes adjacent breakpoints are distinct (same hazard as the
    original torch module's division); no epsilon guard so numerics match.
    """
    slope = (yp[:, 1:] - yp[:, :-1]) / (xp[:, 1:] - xp[:, :-1])          # (C, K-1)
    a = yp[:, :1] - slope[:, :1] * xp[:, :1]                             # (C, 1)
    coef = jnp.concatenate(
        [a, slope[:, :1], slope[:, 1:] - slope[:, :-1]], axis=1)         # (C, K)
    knots = xp[:, 1:-1]                                                  # (C, K-2)
    return jnp.concatenate([coef, knots], axis=1)                        # (C, 2K-2)


# ----------------------------------------------------------------------------
# Tiling heuristics (always pick tiles that divide exactly -> no padding)
# ----------------------------------------------------------------------------
def _pick_lane_tile(cols):
    for tn in (8192, 4096, 2048, 1024, 512, 256, 128):
        if cols % tn == 0:
            return tn
    return cols  # full extent is always a legal last block dim


def _pick_row_tile(rows, num_channels, tn, itemsize):
    sublane = max(8, 32 // itemsize)                          # 8 f32 / 16 bf16 / 32 i8
    unit = (num_channels * sublane) // math.gcd(num_channels, sublane)   # lcm(C, sublane)
    cap = max(unit, (2 * 1024 * 1024) // max(tn * itemsize, 1))          # ~2 MiB blocks
    cap = min(cap, rows, 8192)
    best = None
    m = unit
    while m <= cap:
        if rows % m == 0:
            best = m
        m += unit
    return best if best is not None else rows                # full extent always legal


# ----------------------------------------------------------------------------
# Public wrapper: PWLNormalizorInv.forward
# ----------------------------------------------------------------------------
def pwl_normalizor_inv(x, x_positions, y_starts, y_deltas, monotonicity=1):
    orig_shape = x.shape
    C = orig_shape[1]
    K = x_positions.shape[1]

    xp_inv, yp_inv = _inverse_pwl_tables(x_positions, y_starts, y_deltas,
                                         monotonicity)
    params = _fused_hinge_table(xp_inv, yp_inv)              # (C, 2K-2), f32
    num_hinges = K - 2

    # Contiguous, transpose-free relayout: row r of (B*C, S) has channel r % C.
    rows = orig_shape[0] * C
    cols = math.prod(orig_shape[2:]) if x.ndim > 2 else 1
    x2 = x.reshape(rows, cols)

    itemsize = jnp.dtype(x.dtype).itemsize
    tn = _pick_lane_tile(cols)
    tm = _pick_row_tile(rows, C, tn, itemsize)
    reps = tm // C                                           # tm % C == 0 by construction

    # Per-channel table tiled to the row-tile height; grid-resident (index 0,0).
    params_t = jnp.tile(params, (reps, 1))                   # (tm, 2K-2)

    out2 = pl.pallas_call(
        functools.partial(_pwl_hinge_kernel, num_hinges=num_hinges, knot_off=K),
        out_shape=jax.ShapeDtypeStruct((rows, cols), x.dtype),
        grid_spec=pltpu.PrefetchScalarGridSpec(
            num_scalar_prefetch=0,
            grid=(rows // tm, cols // tn),
            in_specs=[
                pl.BlockSpec(params_t.shape, lambda i, j: (0, 0)),   # resident params
                pl.BlockSpec((tm, tn), lambda i, j: (i, j)),         # x tile
            ],
            out_specs=pl.BlockSpec((tm, tn), lambda i, j: (i, j)),
        ),
        compiler_params=pltpu.CompilerParams(
            dimension_semantics=("parallel", "parallel"),
            vmem_limit_bytes=32 * 1024 * 1024,
        ),
    )(params_t, x2)

    return out2.reshape(orig_shape)


# ----------------------------------------------------------------------------
# Pure numpy reference (count + clip segment selection, float64)
# ----------------------------------------------------------------------------
def _ref_forward(x, xp, yp):
    x = np.asarray(x, np.float64)
    xp = np.asarray(xp, np.float64)
    yp = np.asarray(yp, np.float64)
    C, K = xp.shape
    xf = np.moveaxis(x, 1, -1).reshape(-1, C)                # (N, C)
    cnt = (xp[None, :, :] < xf[:, :, None]).sum(-1)
    idx = np.clip(cnt, 1, K - 1)
    rows = np.arange(C)[None, :]
    x0, x1 = xp[rows, idx - 1], xp[rows, idx]
    y0, y1 = yp[rows, idx - 1], yp[rows, idx]
    out = y0 + (xf - x0) * (y1 - y0) / (x1 - x0)
    out = out.reshape((x.shape[0],) + x.shape[2:] + (C,))
    return np.moveaxis(out, -1, 1)


if __name__ == "__main__":
    B, C, H, W = 2, 4, 16, 16
    num_breakpoints = 8
    K = num_breakpoints + 1
    mono = 1

    key = jax.random.PRNGKey(0)
    k_x, k_d = jax.random.split(key, 2)

    # Inputs to the *inverse* map live in the forward map's y-space (~[-2, 2]).
    x = jax.random.normal(k_x, (B, C, H, W), jnp.float32) * 1.5

    # Peer MonoPointPWL parameters (shapes from MonoPointPWL.__init__):
    base = jnp.linspace(-2.0, 2.0, K)
    x_positions = (base[None, :] * (1.0 + 0.1 * jnp.arange(C)[:, None])
                   ).astype(jnp.float32)                     # (C, K)
    y_starts = (-2.0 + 0.05 * jnp.arange(C)).astype(jnp.float32)   # (C,)
    y_deltas = (jnp.abs(jax.random.normal(k_d, (C, num_breakpoints),
                                          jnp.float32)) * 0.5 + 0.1)  # (C, K-1)

    out = pwl_normalizor_inv(x, x_positions, y_starts, y_deltas, mono)
    out = jax.block_until_ready(out)

    # Self-check against a float64 reference of the inverse PWL map.
    xp_inv, yp_inv = _inverse_pwl_tables(x_positions, y_starts, y_deltas, mono)
    ref = _ref_forward(np.asarray(x), np.asarray(xp_inv), np.asarray(yp_inv))
    np.testing.assert_allclose(np.asarray(out), ref, rtol=1e-4, atol=1e-4)
    assert out.shape == x.shape and out.dtype == x.dtype

    print("KERNEL_OK")
</pallas_src>

<mosaic_0001>
module attributes {stable_mosaic.version = 11 : i64} {
  func.func @_pwl_hinge_kernel(%arg0: i32, %arg1: i32, %arg2: memref<8x16xf32, #tpu.memory_space<vmem>>, %arg3: memref<8x256xf32, #tpu.memory_space<vmem>>, %arg4: memref<8x256xf32, #tpu.memory_space<vmem>>) attributes {dimension_semantics = [#tpu.dimension_semantics<parallel>, #tpu.dimension_semantics<parallel>], iteration_bounds = array<i64: 1, 1>, scalar_prefetch = 0 : i64, scratch_operands = 0 : i64, tpu.core_type = #tpu.core_type<tc>, window_params = [{pipeline_mode = #tpu.pipeline_mode<synchronous>, transform_indices = @transform_0, window_bounds = array<i64: 8, 16>}, {transform_indices = @transform_1, window_bounds = array<i64: 8, 256>}, {transform_indices = @transform_2, window_bounds = array<i64: 8, 256>}]} {
    %c0 = arith.constant 0 : index
    %c0_0 = arith.constant 0 : index
    %0 = vector.load %arg3[%c0, %c0_0] : memref<8x256xf32, #tpu.memory_space<vmem>>, vector<8x256xf32>
    %c0_1 = arith.constant 0 : index
    %c0_2 = arith.constant 0 : index
    %1 = vector.load %arg2[%c0_1, %c0_2] : memref<8x16xf32, #tpu.memory_space<vmem>>, vector<8x1xf32>
    %c0_3 = arith.constant 0 : index
    %c1 = arith.constant 1 : index
    %2 = vector.load %arg2[%c0_3, %c1] : memref<8x16xf32, #tpu.memory_space<vmem>>, vector<8x1xf32>
    %3 = vector.broadcast %2 : vector<8x1xf32> to vector<8x256xf32>
    %4 = arith.mulf %3, %0 : vector<8x256xf32>
    %5 = vector.broadcast %1 : vector<8x1xf32> to vector<8x256xf32>
    %6 = arith.addf %5, %4 : vector<8x256xf32>
    %c0_4 = arith.constant 0 : index
    %c2 = arith.constant 2 : index
    %7 = vector.load %arg2[%c0_4, %c2] : memref<8x16xf32, #tpu.memory_space<vmem>>, vector<8x1xf32>
    %c0_5 = arith.constant 0 : index
    %c9 = arith.constant 9 : index
    %8 = vector.load %arg2[%c0_5, %c9] : memref<8x16xf32, #tpu.memory_space<vmem>>, vector<8x1xf32>
    %9 = vector.broadcast %8 : vector<8x1xf32> to vector<8x256xf32>
    %10 = arith.subf %0, %9 : vector<8x256xf32>
    %cst = arith.constant 0.000000e+00 : f32
    %11 = vector.broadcast %cst : f32 to vector<8x256xf32>
    %12 = arith.maximumf %10, %11 : vector<8x256xf32>
    %13 = vector.broadcast %7 : vector<8x1xf32> to vector<8x256xf32>
    %14 = arith.mulf %13, %12 : vector<8x256xf32>
    %15 = arith.addf %6, %14 : vector<8x256xf32>
    %c0_6 = arith.constant 0 : index
    %c3 = arith.constant 3 : index
    %16 = vector.load %arg2[%c0_6, %c3] : memref<8x16xf32, #tpu.memory_space<vmem>>, vector<8x1xf32>
    %c0_7 = arith.constant 0 : index
    %c10 = arith.constant 10 : index
    %17 = vector.load %arg2[%c0_7, %c10] : memref<8x16xf32, #tpu.memory_space<vmem>>, vector<8x1xf32>
    %18 = vector.broadcast %17 : vector<8x1xf32> to vector<8x256xf32>
    %19 = arith.subf %0, %18 : vector<8x256xf32>
    %cst_8 = arith.constant 0.000000e+00 : f32
    %20 = vector.broadcast %cst_8 : f32 to vector<8x256xf32>
    %21 = arith.maximumf %19, %20 : vector<8x256xf32>
    %22 = vector.broadcast %16 : vector<8x1xf32> to vector<8x256xf32>
    %23 = arith.mulf %22, %21 : vector<8x256xf32>
    %24 = arith.addf %15, %23 : vector<8x256xf32>
    %c0_9 = arith.constant 0 : index
    %c4 = arith.constant 4 : index
    %25 = vector.load %arg2[%c0_9, %c4] : memref<8x16xf32, #tpu.memory_space<vmem>>, vector<8x1xf32>
    %c0_10 = arith.constant 0 : index
    %c11 = arith.constant 11 : index
    %26 = vector.load %arg2[%c0_10, %c11] : memref<8x16xf32, #tpu.memory_space<vmem>>, vector<8x1xf32>
    %27 = vector.broadcast %26 : vector<8x1xf32> to vector<8x256xf32>
    %28 = arith.subf %0, %27 : vector<8x256xf32>
    %cst_11 = arith.constant 0.000000e+00 : f32
    %29 = vector.broadcast %cst_11 : f32 to vector<8x256xf32>
    %30 = arith.maximumf %28, %29 : vector<8x256xf32>
    %31 = vector.broadcast %25 : vector<8x1xf32> to vector<8x256xf32>
    %32 = arith.mulf %31, %30 : vector<8x256xf32>
    %33 = arith.addf %24, %32 : vector<8x256xf32>
    %c0_12 = arith.constant 0 : index
    %c5 = arith.constant 5 : index
    %34 = vector.load %arg2[%c0_12, %c5] : memref<8x16xf32, #tpu.memory_space<vmem>>, vector<8x1xf32>
    %c0_13 = arith.constant 0 : index
    %c12 = arith.constant 12 : index
    %35 = vector.load %arg2[%c0_13, %c12] : memref<8x16xf32, #tpu.memory_space<vmem>>, vector<8x1xf32>
    %36 = vector.broadcast %35 : vector<8x1xf32> to vector<8x256xf32>
    %37 = arith.subf %0, %36 : vector<8x256xf32>
    %cst_14 = arith.constant 0.000000e+00 : f32
    %38 = vector.broadcast %cst_14 : f32 to vector<8x256xf32>
    %39 = arith.maximumf %37, %38 : vector<8x256xf32>
    %40 = vector.broadcast %34 : vector<8x1xf32> to vector<8x256xf32>
    %41 = arith.mulf %40, %39 : vector<8x256xf32>
    %42 = arith.addf %33, %41 : vector<8x256xf32>
    %c0_15 = arith.constant 0 : index
    %c6 = arith.constant 6 : index
    %43 = vector.load %arg2[%c0_15, %c6] : memref<8x16xf32, #tpu.memory_space<vmem>>, vector<8x1xf32>
    %c0_16 = arith.constant 0 : index
    %c13 = arith.constant 13 : index
    %44 = vector.load %arg2[%c0_16, %c13] : memref<8x16xf32, #tpu.memory_space<vmem>>, vector<8x1xf32>
    %45 = vector.broadcast %44 : vector<8x1xf32> to vector<8x256xf32>
    %46 = arith.subf %0, %45 : vector<8x256xf32>
    %cst_17 = arith.constant 0.000000e+00 : f32
    %47 = vector.broadcast %cst_17 : f32 to vector<8x256xf32>
    %48 = arith.maximumf %46, %47 : vector<8x256xf32>
    %49 = vector.broadcast %43 : vector<8x1xf32> to vector<8x256xf32>
    %50 = arith.mulf %49, %48 : vector<8x256xf32>
    %51 = arith.addf %42, %50 : vector<8x256xf32>
    %c0_18 = arith.constant 0 : index
    %c7 = arith.constant 7 : index
    %52 = vector.load %arg2[%c0_18, %c7] : memref<8x16xf32, #tpu.memory_space<vmem>>, vector<8x1xf32>
    %c0_19 = arith.constant 0 : index
    %c14 = arith.constant 14 : index
    %53 = vector.load %arg2[%c0_19, %c14] : memref<8x16xf32, #tpu.memory_space<vmem>>, vector<8x1xf32>
    %54 = vector.broadcast %53 : vector<8x1xf32> to vector<8x256xf32>
    %55 = arith.subf %0, %54 : vector<8x256xf32>
    %cst_20 = arith.constant 0.000000e+00 : f32
    %56 = vector.broadcast %cst_20 : f32 to vector<8x256xf32>
    %57 = arith.maximumf %55, %56 : vector<8x256xf32>
    %58 = vector.broadcast %52 : vector<8x1xf32> to vector<8x256xf32>
    %59 = arith.mulf %58, %57 : vector<8x256xf32>
    %60 = arith.addf %51, %59 : vector<8x256xf32>
    %c0_21 = arith.constant 0 : index
    %c8 = arith.constant 8 : index
    %61 = vector.load %arg2[%c0_21, %c8] : memref<8x16xf32, #tpu.memory_space<vmem>>, vector<8x1xf32>
    %c0_22 = arith.constant 0 : index
    %c15 = arith.constant 15 : index
    %62 = vector.load %arg2[%c0_22, %c15] : memref<8x16xf32, #tpu.memory_space<vmem>>, vector<8x1xf32>
    %63 = vector.broadcast %62 : vector<8x1xf32> to vector<8x256xf32>
    %64 = arith.subf %0, %63 : vector<8x256xf32>
    %cst_23 = arith.constant 0.000000e+00 : f32
    %65 = vector.broadcast %cst_23 : f32 to vector<8x256xf32>
    %66 = arith.maximumf %64, %65 : vector<8x256xf32>
    %67 = vector.broadcast %61 : vector<8x1xf32> to vector<8x256xf32>
    %68 = arith.mulf %67, %66 : vector<8x256xf32>
    %69 = arith.addf %60, %68 : vector<8x256xf32>
    %c0_24 = arith.constant 0 : index
    %c0_25 = arith.constant 0 : index
    %70 = vector.load %arg4[%c0_24, %c0_25] : memref<8x256xf32, #tpu.memory_space<vmem>>, vector<8x256xf32>
    tpu.vector_store %arg4[%c0_24, %c0_25], %69 {strides = array<i32>} : memref<8x256xf32, #tpu.memory_space<vmem>>, vector<8x256xf32>,
    return
  }
  func.func @transform_0(%arg0: i32, %arg1: i32) -> (i32, i32) {
    %c0_i32 = arith.constant 0 : i32
    %c0_i32_0 = arith.constant 0 : i32
    %c0_i32_1 = arith.constant 0 : i32
    return %c0_i32, %c0_i32_0 : i32, i32
  }
  func.func @transform_1(%arg0: i32, %arg1: i32) -> (i32, i32) {
    %c0_i32 = arith.constant 0 : i32
    return %arg0, %arg1 : i32, i32
  }
  func.func @transform_2(%arg0: i32, %arg1: i32) -> (i32, i32) {
    %c0_i32 = arith.constant 0 : i32
    return %arg0, %arg1 : i32, i32
  }
}

</mosaic_0001>

<llo_original>
// kernel: tpu_custom_call.1
$region0: #{tpu_custom_call.1}
  #allocation0 [shape = 'u32[]', space=smem, size = 0x4, offset = 0x4, fixed_abs, tag = 'smem constant byte address 0x4 - core index']
  #allocation1 [shape = 'u32[144,128]{1,0:T(1,128)}', space=vmem, size = 0x12000, scoped, tag = 'internal scratch']
  %s0 = inlined_call_operand.hbm [shape: f32[8,16], index: 0, kind: input, shape index: {}]
  %s1 = inlined_call_operand.hbm [shape: f32[8,256], index: 1, kind: input, shape index: {}]
  %s2 = inlined_call_operand.hbm [shape: f32[8,256], index: 2, kind: output, shape index: {}]
  %s3 = sld [smem:[#allocation0]]
  $region26: #{tpu_custom_call.1} parent=0
    _
  %s5 = ssub.s32 1, %s3
  %s6 = scalar_select 0, %s5, %s3
  $region1: #{tpu_custom_call.1} parent=0
    #allocation2 [shape = 'u8[4096]{0}', space=vmem, size = 0x1000, scoped, tag = 'input window, operand 0, single buffered']
    #allocation3 [shape = 's32[1]{0}', space=sflag, size = 0x4, scoped, tag = 'scoped memory for tpu_custom_call.1']
    #allocation4 [shape = 's32[1]{0}', space=sflag, size = 0x4, scoped, tag = 'scoped memory for tpu_custom_call.1']
    #allocation5 [shape = 'u8[8192]{0}', space=vmem, size = 0x2000, scoped, tag = 'input window, operand 1, single buffered']
    #allocation6 [shape = 's32[1]{0}', space=sflag, size = 0x4, scoped, tag = 'scoped memory for tpu_custom_call.1']
    #allocation7 [shape = 'u8[8192]{0}', space=vmem, size = 0x2000, scoped, tag = 'output window, operand 0, single buffered']
    %7 = vsyncpa [#allocation3], 0
    %8 = vsyncpa [#allocation6], 0
    %9 = vsyncpa [#allocation4], 0
    // Predicated region
    $region2: #{tpu_custom_call.1} parent=1 // pred_check
      _
    $region3: #{tpu_custom_call.1} parent=1 // pred_check_branch
      %11 = sbr.rel (0) target = $region5
    $region4: #{tpu_custom_call.1} parent=1 // pred_region
      %s13 = ssub.s32 128, 128
      %14 = vsyncadd [#allocation3], %s13
      %s16 = sshll.u32 [#allocation2], 4
      %s17 = int_to_ptr.vmem [resolvable:$true] %s16
      %19 = dma.hbm_to_vmem [thread:$0]  %s0, 128, %s17, [#allocation3]
    $region5: #{tpu_custom_call.1} parent=1 // pred_fallthru
      _
    // Predicated region
    $region6: #{tpu_custom_call.1} parent=1 // pred_check
      _
    $region7: #{tpu_custom_call.1} parent=1 // pred_check_branch
      %21 = sbr.rel (0) target = $region9
    $region8: #{tpu_custom_call.1} parent=1 // pred_region
      %s23 = ssub.s32 256, 256
      %24 = vsyncadd [#allocation6], %s23
      %s26 = sshll.u32 [#allocation5], 4
      %s27 = int_to_ptr.vmem [resolvable:$true] %s26
      %29 = dma.hbm_to_vmem [thread:$0]  %s1, 256, %s27, [#allocation6]
    $region9: #{tpu_custom_call.1} parent=1 // pred_fallthru
      _
    // Predicated region
    $region10: #{tpu_custom_call.1} parent=1 // pred_check
      _
    $region11: #{tpu_custom_call.1} parent=1 // pred_check_branch
      %31 = sbr.rel (0) target = $region13
    $region12: #{tpu_custom_call.1} parent=1 // pred_region
      %32 = dma.done [#allocation3], 128
    $region13: #{tpu_custom_call.1} parent=1 // pred_fallthru
      _
    // Predicated region
    $region14: #{tpu_custom_call.1} parent=1 // pred_check
      _
    $region15: #{tpu_custom_call.1} parent=1 // pred_check_branch
      %34 = sbr.rel (0) target = $region17
    $region16: #{tpu_custom_call.1} parent=1 // pred_region
      %35 = dma.done [#allocation6], 256
    $region17: #{tpu_custom_call.1} parent=1 // pred_fallthru
      _
    %v36 = vld [vmem:[#allocation5] sm:$0xff]
    %v37 = vld [vmem:[#allocation5 + $0x8] sm:$0xff]
    %v38 = vld [vmem:[#allocation2] sm:$0xff]
    %40 = vset.pattern.permute.xlu0 1
    %41 = vperm.xlu0 %40, %v38
    %v42 = vpop.permute.xlu0 %41
    %v44 = vmul.f32 %v42, %v36
    %v45 = vmul.f32 %v42, %v37
    %46 = vset.pattern.permute.xlu0 0
    %47 = vperm.xlu0 %46, %v38
    %v48 = vpop.permute.xlu0 %47
    %v50 = vadd.f32 %v48, %v44
    %v51 = vadd.f32 %v48, %v45
    %52 = vset.pattern.permute.xlu0 9
    %53 = vperm.xlu0 %52, %v38
    %v54 = vpop.permute.xlu0 %53
    %v56 = vsub.f32 %v36, %v54
    %v57 = vsub.f32 %v37, %v54
    %v58 = vmax.f32 %v56, 0.0
    %v59 = vmax.f32 %v57, 0.0
    %60 = vset.pattern.permute.xlu0 2
    %61 = vperm.xlu0 %60, %v38
    %v62 = vpop.permute.xlu0 %61
    %v64 = vmul.f32 %v62, %v58
    %v65 = vmul.f32 %v62, %v59
    %v66 = vadd.f32 %v50, %v64
    %v67 = vadd.f32 %v51, %v65
    %68 = vset.pattern.permute.xlu0 10
    %69 = vperm.xlu0 %68, %v38
    %v70 = vpop.permute.xlu0 %69
    %v72 = vsub.f32 %v36, %v70
    %v73 = vsub.f32 %v37, %v70
    %v74 = vmax.f32 %v72, 0.0
    %v75 = vmax.f32 %v73, 0.0
    %76 = vset.pattern.permute.xlu0 3
    %77 = vperm.xlu0 %76, %v38
    %v78 = vpop.permute.xlu0 %77
    %v80 = vmul.f32 %v78, %v74
    %v81 = vmul.f32 %v78, %v75
    %v82 = vadd.f32 %v66, %v80
    %v83 = vadd.f32 %v67, %v81
    %84 = vset.pattern.permute.xlu0 11
    %85 = vperm.xlu0 %84, %v38
    %v86 = vpop.permute.xlu0 %85
    %v88 = vsub.f32 %v36, %v86
    %v89 = vsub.f32 %v37, %v86
    %v90 = vmax.f32 %v88, 0.0
    %v91 = vmax.f32 %v89, 0.0
    %92 = vset.pattern.permute.xlu0 4
    %93 = vperm.xlu0 %92, %v38
    %v94 = vpop.permute.xlu0 %93
    %v96 = vmul.f32 %v94, %v90
    %v97 = vmul.f32 %v94, %v91
    %v98 = vadd.f32 %v82, %v96
    %v99 = vadd.f32 %v83, %v97
    %100 = vset.pattern.permute.xlu0 12
    %101 = vperm.xlu0 %100, %v38
    %v102 = vpop.permute.xlu0 %101
    %v104 = vsub.f32 %v36, %v102
    %v105 = vsub.f32 %v37, %v102
    %v106 = vmax.f32 %v104, 0.0
    %v107 = vmax.f32 %v105, 0.0
    %108 = vset.pattern.permute.xlu0 5
    %109 = vperm.xlu0 %108, %v38
    %v110 = vpop.permute.xlu0 %109
    %v112 = vmul.f32 %v110, %v106
    %v113 = vmul.f32 %v110, %v107
    %v114 = vadd.f32 %v98, %v112
    %v115 = vadd.f32 %v99, %v113
    %116 = vset.pattern.permute.xlu0 13
    %117 = vperm.xlu0 %116, %v38
    %v118 = vpop.permute.xlu0 %117
    %v120 = vsub.f32 %v36, %v118
    %v121 = vsub.f32 %v37, %v118
    %v122 = vmax.f32 %v120, 0.0
    %v123 = vmax.f32 %v121, 0.0
    %124 = vset.pattern.permute.xlu0 6
    %125 = vperm.xlu0 %124, %v38
    %v126 = vpop.permute.xlu0 %125
    %v128 = vmul.f32 %v126, %v122
    %v129 = vmul.f32 %v126, %v123
    %v130 = vadd.f32 %v114, %v128
    %v131 = vadd.f32 %v115, %v129
    %132 = vset.pattern.permute.xlu0 14
    %133 = vperm.xlu0 %132, %v38
    %v134 = vpop.permute.xlu0 %133
    %v136 = vsub.f32 %v36, %v134
    %v137 = vsub.f32 %v37, %v134
    %v138 = vmax.f32 %v136, 0.0
    %v139 = vmax.f32 %v137, 0.0
    %140 = vset.pattern.permute.xlu0 7
    %141 = vperm.xlu0 %140, %v38
    %v142 = vpop.permute.xlu0 %141
    %v144 = vmul.f32 %v142, %v138
    %v145 = vmul.f32 %v142, %v139
    %v146 = vadd.f32 %v130, %v144
    %v147 = vadd.f32 %v131, %v145
    %148 = vset.pattern.permute.xlu0 15
    %149 = vperm.xlu0 %148, %v38
    %v150 = vpop.permute.xlu0 %149
    %v152 = vsub.f32 %v36, %v150
    %v153 = vsub.f32 %v37, %v150
    %v154 = vmax.f32 %v152, 0.0
    %v155 = vmax.f32 %v153, 0.0
    %156 = vset.pattern.permute.xlu0 8
    %157 = vperm.xlu0 %156, %v38
    %v158 = vpop.permute.xlu0 %157
    %v160 = vmul.f32 %v158, %v154
    %v161 = vmul.f32 %v158, %v155
    %v162 = vadd.f32 %v146, %v160
    %v163 = vadd.f32 %v147, %v161
    %164 = vst [vmem:[#allocation7] sm:$0xff] %v162
    %165 = vst [vmem:[#allocation7 + $0x8] sm:$0xff] %v163
    // Predicated region
    $region18: #{tpu_custom_call.1} parent=1 // pred_check
      _
    $region19: #{tpu_custom_call.1} parent=1 // pred_check_branch
      %167 = sbr.rel (0) target = $region21
    $region20: #{tpu_custom_call.1} parent=1 // pred_region
      %s169 = ssub.s32 256, 256
      %170 = vsyncadd [#allocation4], %s169
      %s172 = sshll.u32 [#allocation7], 4
      %s173 = int_to_ptr.vmem [resolvable:$true] %s172
      %175 = dma.vmem_to_hbm [thread:$0]  %s173, 256, %s2, [#allocation4]
    $region21: #{tpu_custom_call.1} parent=1 // pred_fallthru
      _
    // Predicated region
    $region22: #{tpu_custom_call.1} parent=1 // pred_check
      _
    $region23: #{tpu_custom_call.1} parent=1 // pred_check_branch
      %177 = sbr.rel (0) target = $region25
    $region24: #{tpu_custom_call.1} parent=1 // pred_region
      %178 = dma.done [#allocation4], 256
    $region25: #{tpu_custom_call.1} parent=1 // pred_fallthru
      _
    %179 = vsyncpa [#allocation3], 1
    %180 = vsyncpa [#allocation6], 1
    %181 = vsyncpa [#allocation4], 1

</llo_original>
